<compile_context>
chip_gen: v5e
topology: v5e:2x2
jax: 0.10.0
libtpu: 0.0.40
codegen_flags: <defaults>
</compile_context>

<pallas_src>
import jax
import jax.numpy as jnp
from jax import lax
from jax.experimental import pallas as pl
from jax.experimental.pallas import tpu as pltpu

EPS = 1e-5
_TAPS = tuple((dh, dw) for dh in (-1, 0, 1) for dw in (-1, 0, 1))


def _make_residual_block_kernel(N, C, H, W):
    NC = N * C
    HW = H * W
    inv_r = 1.0 / float(N * HW)

    def kernel(x_ref, m_ref, w1_ref, b1_ref, g1_ref, be1_ref, a_ref,
               w2_ref, b2_ref, g2_ref, be2_ref, o_ref):
        # Per-tap boundary masks, loaded once; each (1, HW), broadcast over the
        # NC sublanes.  They fold the roll wrap-around and the 3x3 zero padding
        # into a single multiply per tap.
        masks = [m_ref[t] for t in range(len(_TAPS))]

        x = x_ref[...]                                      # (NC, HW) f32

        def conv3x3(y, w_ref, b_ref):
            # Hoisted per-tap shift + mask: one XLU roll + one VPU multiply per
            # tap on the whole stack, reused for every (ci, co) pair.
            planes = []
            for t, (dh, dw) in enumerate(_TAPS):
                d = dh * W + dw
                v = y if d == 0 else pltpu.roll(y, shift=(-d) % HW, axis=1)
                planes.append(v * masks[t])
            # Channel mix for all 9 taps in ONE MXU matmul against the
            # block-diagonal weight matrix (NC, 9*NC) built in the wrapper.
            s = jnp.concatenate(planes, axis=0)             # (9*NC, HW)
            out = jnp.dot(w_ref[...], s,
                          preferred_element_type=jnp.float32)
            return out + b_ref[...]                         # bias rows (NC, 1)

        def channel_sum(v):
            # Per-row sum over all (n, h, w) elements of that row's channel.
            # Rows are n-major / c-minor, so rolling by multiples of C along the
            # sublane axis cycles the batch index at fixed channel.
            acc = v
            for k in range(1, N):
                acc = acc + pltpu.roll(v, shift=k * C, axis=0)
            return jnp.sum(acc, axis=1, keepdims=True)      # (NC, 1)

        def batchnorm(y, g_ref, be_ref):
            # Training-mode BN: batch statistics, biased variance; two-pass
            # (centered) variance for numerical robustness.
            mean = channel_sum(y) * inv_r                   # (NC, 1)
            yc = y - mean
            var = channel_sum(yc * yc) * inv_r              # (NC, 1)
            scale = g_ref[...] * lax.rsqrt(var + EPS)       # (NC, 1)
            return yc * scale + be_ref[...]

        y = conv3x3(x, w1_ref, b1_ref)
        y = batchnorm(y, g1_ref, be1_ref)
        alpha = a_ref[0]                                    # PReLU scalar (SMEM)
        y = jnp.where(y >= 0.0, y, alpha * y)
        y = conv3x3(y, w2_ref, b2_ref)
        y = batchnorm(y, g2_ref, be2_ref)

        # Residual add + a single lane-dense store of the stacked block.
        o_ref[...] = (x + y).astype(o_ref.dtype)

    return kernel


def _tap_masks(H, W):
    # (9, 1, HW): mask[t, 0, p] = 1 iff the tap (dh, dw) at flattened position p
    # stays inside the image (handles both padding and roll wrap-around).
    HW = H * W
    hh = jnp.arange(HW, dtype=jnp.int32) // W
    ww = jnp.arange(HW, dtype=jnp.int32) % W
    ms = []
    for dh, dw in _TAPS:
        valid = ((hh + dh >= 0) & (hh + dh < H) &
                 (ww + dw >= 0) & (ww + dw < W))
        ms.append(valid.astype(jnp.float32).reshape(1, 1, HW))
    return jnp.concatenate(ms, axis=0)


def _block_diag_weight(w_oihw, N):
    # (C, C, 3, 3) OIHW -> (N*C, 9*N*C).  Per tap: kron(I_N, W_tap); columns
    # ordered tap-major / batch-major / in-channel-minor, matching the stacked
    # operand built inside the kernel.
    w = w_oihw.astype(jnp.float32)
    eye = jnp.eye(N, dtype=jnp.float32)
    blocks = [jnp.kron(eye, w[:, :, dh + 1, dw + 1]) for dh, dw in _TAPS]
    return jnp.concatenate(blocks, axis=1)


def _per_row(v, N):
    # (C,) -> (N*C, 1): one value per stacked row (n-major, c-minor).
    return jnp.tile(v.astype(jnp.float32).reshape(-1), (N,)).reshape(-1, 1)


def residual_block(x_nchw, params):
    """x_nchw: (N, C, H, W) float32 — same convention as the PyTorch module."""
    N, C, H, W = x_nchw.shape
    NC, HW = N * C, H * W

    # NCHW -> (N*C, HW): free contiguous reshape; HW on lanes, N*C on sublanes.
    x2 = x_nchw.reshape(NC, HW).astype(jnp.float32)

    masks = _tap_masks(H, W)
    w1 = _block_diag_weight(params["w1"], N)
    w2 = _block_diag_weight(params["w2"], N)
    b1 = _per_row(params["b1"], N)
    b2 = _per_row(params["b2"], N)
    g1 = _per_row(params["g1"], N)
    g2 = _per_row(params["g2"], N)
    be1 = _per_row(params["be1"], N)
    be2 = _per_row(params["be2"], N)
    alpha = params["alpha"].reshape(-1).astype(jnp.float32)   # (1,)

    vmem = pl.BlockSpec(memory_space=pltpu.MemorySpace.VMEM)
    smem = pl.BlockSpec(memory_space=pltpu.MemorySpace.SMEM)

    # Explicit VMEM budget sized to the resident block (the scoped default is
    # 16/32 MiB — far below physical VMEM), clamped to stay legal on v7x.
    block_bytes = 4 * NC * HW
    vmem_limit = int(min(32 * 1024 * 1024,
                         max(4 * 1024 * 1024, 64 * block_bytes)))

    out = pl.pallas_call(
        _make_residual_block_kernel(N, C, H, W),
        out_shape=jax.ShapeDtypeStruct((NC, HW), jnp.float32),
        in_specs=[vmem, vmem, vmem, vmem, vmem, vmem, smem,
                  vmem, vmem, vmem, vmem],
        out_specs=vmem,
        compiler_params=pltpu.CompilerParams(vmem_limit_bytes=vmem_limit),
    )(x2, masks, w1, b1, g1, be1, alpha, w2, b2, g2, be2)

    return out.reshape(N, C, H, W)


def reference(x_nchw, p):
    """Pure-JAX reference matching the PyTorch forward (training-mode BN)."""
    def conv(y, w, b):
        y = lax.conv_general_dilated(y, w, (1, 1), "SAME",
                                     dimension_numbers=("NCHW", "OIHW", "NCHW"))
        return y + b[None, :, None, None]

    def bn(y, g, b):
        mean = jnp.mean(y, axis=(0, 2, 3), keepdims=True)
        var = jnp.mean((y - mean) ** 2, axis=(0, 2, 3), keepdims=True)
        return ((y - mean) * lax.rsqrt(var + EPS) * g[None, :, None, None]
                + b[None, :, None, None])

    y = conv(x_nchw, p["w1"], p["b1"])
    y = bn(y, p["g1"], p["be1"])
    y = jnp.where(y >= 0.0, y, p["alpha"] * y)
    y = conv(y, p["w2"], p["b2"])
    y = bn(y, p["g2"], p["be2"])
    return x_nchw + y


if __name__ == "__main__":
    N, C, H, W = 2, 4, 16, 16
    key = jax.random.PRNGKey(0)
    ks = jax.random.split(key, 7)
    x = jax.random.normal(ks[0], (N, C, H, W), jnp.float32)

    params = {
        "w1": 0.1 * jax.random.normal(ks[1], (C, C, 3, 3), jnp.float32),
        "b1": 0.1 * jax.random.normal(ks[2], (C,), jnp.float32),
        "g1": 1.0 + 0.1 * jax.random.normal(ks[3], (C,), jnp.float32),
        "be1": 0.1 * jax.random.normal(ks[4], (C,), jnp.float32),
        "alpha": jnp.array(0.25, jnp.float32),          # nn.PReLU() default
        "w2": 0.1 * jax.random.normal(ks[5], (C, C, 3, 3), jnp.float32),
        "b2": 0.1 * jax.random.normal(ks[6], (C,), jnp.float32),
        "g2": jnp.ones((C,), jnp.float32),              # BN defaults
        "be2": jnp.zeros((C,), jnp.float32),
    }

    out = jax.block_until_ready(residual_block(x, params))
    ref = jax.block_until_ready(reference(x, params))

    assert out.shape == x.shape and out.dtype == x.dtype
    if not jnp.allclose(out, ref, atol=1e-3, rtol=1e-3):
        raise AssertionError(
            f"mismatch, max abs err = {float(jnp.max(jnp.abs(out - ref)))}")
    print("KERNEL_OK")
</pallas_src>

<mosaic_0001>
module attributes {stable_mosaic.version = 11 : i64} {
  func.func @kernel(%arg0: memref<8x256xf32, #tpu.memory_space<vmem>>, %arg1: memref<9x1x256xf32, #tpu.memory_space<vmem>>, %arg2: memref<8x72xf32, #tpu.memory_space<vmem>>, %arg3: memref<8x1xf32, #tpu.memory_space<vmem>>, %arg4: memref<8x1xf32, #tpu.memory_space<vmem>>, %arg5: memref<8x1xf32, #tpu.memory_space<vmem>>, %arg6: memref<1xf32, #tpu.memory_space<smem>>, %arg7: memref<8x72xf32, #tpu.memory_space<vmem>>, %arg8: memref<8x1xf32, #tpu.memory_space<vmem>>, %arg9: memref<8x1xf32, #tpu.memory_space<vmem>>, %arg10: memref<8x1xf32, #tpu.memory_space<vmem>>, %arg11: memref<8x256xf32, #tpu.memory_space<vmem>>) attributes {dimension_semantics = [], scalar_prefetch = 0 : i64, scratch_operands = 0 : i64, tpu.core_type = #tpu.core_type<tc>} {
    %c0 = arith.constant 0 : index
    %c0_0 = arith.constant 0 : index
    %c0_1 = arith.constant 0 : index
    %0 = vector.load %arg1[%c0, %c0_0, %c0_1] : memref<9x1x256xf32, #tpu.memory_space<vmem>>, vector<1x1x256xf32>
    %1 = vector.shape_cast %0 : vector<1x1x256xf32> to vector<1x256xf32>
    %c1 = arith.constant 1 : index
    %c0_2 = arith.constant 0 : index
    %c0_3 = arith.constant 0 : index
    %2 = vector.load %arg1[%c1, %c0_2, %c0_3] : memref<9x1x256xf32, #tpu.memory_space<vmem>>, vector<1x1x256xf32>
    %3 = vector.shape_cast %2 : vector<1x1x256xf32> to vector<1x256xf32>
    %c2 = arith.constant 2 : index
    %c0_4 = arith.constant 0 : index
    %c0_5 = arith.constant 0 : index
    %4 = vector.load %arg1[%c2, %c0_4, %c0_5] : memref<9x1x256xf32, #tpu.memory_space<vmem>>, vector<1x1x256xf32>
    %5 = vector.shape_cast %4 : vector<1x1x256xf32> to vector<1x256xf32>
    %c3 = arith.constant 3 : index
    %c0_6 = arith.constant 0 : index
    %c0_7 = arith.constant 0 : index
    %6 = vector.load %arg1[%c3, %c0_6, %c0_7] : memref<9x1x256xf32, #tpu.memory_space<vmem>>, vector<1x1x256xf32>
    %7 = vector.shape_cast %6 : vector<1x1x256xf32> to vector<1x256xf32>
    %c4 = arith.constant 4 : index
    %c0_8 = arith.constant 0 : index
    %c0_9 = arith.constant 0 : index
    %8 = vector.load %arg1[%c4, %c0_8, %c0_9] : memref<9x1x256xf32, #tpu.memory_space<vmem>>, vector<1x1x256xf32>
    %9 = vector.shape_cast %8 : vector<1x1x256xf32> to vector<1x256xf32>
    %c5 = arith.constant 5 : index
    %c0_10 = arith.constant 0 : index
    %c0_11 = arith.constant 0 : index
    %10 = vector.load %arg1[%c5, %c0_10, %c0_11] : memref<9x1x256xf32, #tpu.memory_space<vmem>>, vector<1x1x256xf32>
    %11 = vector.shape_cast %10 : vector<1x1x256xf32> to vector<1x256xf32>
    %c6 = arith.constant 6 : index
    %c0_12 = arith.constant 0 : index
    %c0_13 = arith.constant 0 : index
    %12 = vector.load %arg1[%c6, %c0_12, %c0_13] : memref<9x1x256xf32, #tpu.memory_space<vmem>>, vector<1x1x256xf32>
    %13 = vector.shape_cast %12 : vector<1x1x256xf32> to vector<1x256xf32>
    %c7 = arith.constant 7 : index
    %c0_14 = arith.constant 0 : index
    %c0_15 = arith.constant 0 : index
    %14 = vector.load %arg1[%c7, %c0_14, %c0_15] : memref<9x1x256xf32, #tpu.memory_space<vmem>>, vector<1x1x256xf32>
    %15 = vector.shape_cast %14 : vector<1x1x256xf32> to vector<1x256xf32>
    %c8 = arith.constant 8 : index
    %c0_16 = arith.constant 0 : index
    %c0_17 = arith.constant 0 : index
    %16 = vector.load %arg1[%c8, %c0_16, %c0_17] : memref<9x1x256xf32, #tpu.memory_space<vmem>>, vector<1x1x256xf32>
    %17 = vector.shape_cast %16 : vector<1x1x256xf32> to vector<1x256xf32>
    %c0_18 = arith.constant 0 : index
    %c0_19 = arith.constant 0 : index
    %18 = vector.load %arg0[%c0_18, %c0_19] : memref<8x256xf32, #tpu.memory_space<vmem>>, vector<8x256xf32>
    %c17_i32 = arith.constant 17 : i32
    %19 = tpu.dynamic_rotate %18 by %c17_i32 dim 1 : vector<8x256xf32>, i32 -> vector<8x256xf32>
    %20 = vector.broadcast %1 : vector<1x256xf32> to vector<8x256xf32>
    %21 = arith.mulf %19, %20 : vector<8x256xf32>
    %c16_i32 = arith.constant 16 : i32
    %22 = tpu.dynamic_rotate %18 by %c16_i32 dim 1 : vector<8x256xf32>, i32 -> vector<8x256xf32>
    %23 = vector.broadcast %3 : vector<1x256xf32> to vector<8x256xf32>
    %24 = arith.mulf %22, %23 : vector<8x256xf32>
    %c15_i32 = arith.constant 15 : i32
    %25 = tpu.dynamic_rotate %18 by %c15_i32 dim 1 : vector<8x256xf32>, i32 -> vector<8x256xf32>
    %26 = vector.broadcast %5 : vector<1x256xf32> to vector<8x256xf32>
    %27 = arith.mulf %25, %26 : vector<8x256xf32>
    %c1_i32 = arith.constant 1 : i32
    %28 = tpu.dynamic_rotate %18 by %c1_i32 dim 1 : vector<8x256xf32>, i32 -> vector<8x256xf32>
    %29 = vector.broadcast %7 : vector<1x256xf32> to vector<8x256xf32>
    %30 = arith.mulf %28, %29 : vector<8x256xf32>
    %31 = vector.broadcast %9 : vector<1x256xf32> to vector<8x256xf32>
    %32 = arith.mulf %18, %31 : vector<8x256xf32>
    %c255_i32 = arith.constant 255 : i32
    %33 = tpu.dynamic_rotate %18 by %c255_i32 dim 1 : vector<8x256xf32>, i32 -> vector<8x256xf32>
    %34 = vector.broadcast %11 : vector<1x256xf32> to vector<8x256xf32>
    %35 = arith.mulf %33, %34 : vector<8x256xf32>
    %c241_i32 = arith.constant 241 : i32
    %36 = tpu.dynamic_rotate %18 by %c241_i32 dim 1 : vector<8x256xf32>, i32 -> vector<8x256xf32>
    %37 = vector.broadcast %13 : vector<1x256xf32> to vector<8x256xf32>
    %38 = arith.mulf %36, %37 : vector<8x256xf32>
    %c240_i32 = arith.constant 240 : i32
    %39 = tpu.dynamic_rotate %18 by %c240_i32 dim 1 : vector<8x256xf32>, i32 -> vector<8x256xf32>
    %40 = vector.broadcast %15 : vector<1x256xf32> to vector<8x256xf32>
    %41 = arith.mulf %39, %40 : vector<8x256xf32>
    %c239_i32 = arith.constant 239 : i32
    %42 = tpu.dynamic_rotate %18 by %c239_i32 dim 1 : vector<8x256xf32>, i32 -> vector<8x256xf32>
    %43 = vector.broadcast %17 : vector<1x256xf32> to vector<8x256xf32>
    %44 = arith.mulf %42, %43 : vector<8x256xf32>
    %45 = tpu.concatenate %21, %24, %27, %30, %32, %35, %38, %41, %44 in 0 : vector<8x256xf32>, vector<8x256xf32>, vector<8x256xf32>, vector<8x256xf32>, vector<8x256xf32>, vector<8x256xf32>, vector<8x256xf32>, vector<8x256xf32>, vector<8x256xf32> -> vector<72x256xf32>
    %c0_20 = arith.constant 0 : index
    %c0_21 = arith.constant 0 : index
    %46 = vector.load %arg2[%c0_20, %c0_21] : memref<8x72xf32, #tpu.memory_space<vmem>>, vector<8x72xf32>
    %cst = arith.constant dense<0.000000e+00> : vector<8x256xf32>
    %47 = tpu.matmul %46, %45, %cst {dimension_numbers = #tpu.dot_dimension_numbers<[1], [0], [0], [1], [0, 0, 1, 1], [], []>} : vector<8x72xf32>, vector<72x256xf32>, vector<8x256xf32> -> vector<8x256xf32>
    %c0_22 = arith.constant 0 : index
    %c0_23 = arith.constant 0 : index
    %48 = vector.load %arg3[%c0_22, %c0_23] : memref<8x1xf32, #tpu.memory_space<vmem>>, vector<8x1xf32>
    %49 = vector.broadcast %48 : vector<8x1xf32> to vector<8x256xf32>
    %50 = arith.addf %47, %49 : vector<8x256xf32>
    %c4_i32 = arith.constant 4 : i32
    %51 = tpu.dynamic_rotate %50 by %c4_i32 dim 0 : vector<8x256xf32>, i32 -> vector<8x256xf32>
    %52 = arith.addf %50, %51 : vector<8x256xf32>
    %cst_24 = arith.constant dense<0.000000e+00> : vector<8xf32>
    %53 = vector.multi_reduction <add>, %52, %cst_24 [1] : vector<8x256xf32> to vector<8xf32>
    %54 = vector.shape_cast %53 : vector<8xf32> to vector<8x1xf32>
    %cst_25 = arith.constant 0.001953125 : f32
    %55 = vector.broadcast %cst_25 : f32 to vector<8x1xf32>
    %56 = arith.mulf %54, %55 : vector<8x1xf32>
    %57 = vector.broadcast %56 : vector<8x1xf32> to vector<8x256xf32>
    %58 = arith.subf %50, %57 : vector<8x256xf32>
    %59 = arith.mulf %58, %58 : vector<8x256xf32>
    %c4_i32_26 = arith.constant 4 : i32
    %60 = tpu.dynamic_rotate %59 by %c4_i32_26 dim 0 : vector<8x256xf32>, i32 -> vector<8x256xf32>
    %61 = arith.addf %59, %60 : vector<8x256xf32>
    %cst_27 = arith.constant dense<0.000000e+00> : vector<8xf32>
    %62 = vector.multi_reduction <add>, %61, %cst_27 [1] : vector<8x256xf32> to vector<8xf32>
    %63 = vector.shape_cast %62 : vector<8xf32> to vector<8x1xf32>
    %cst_28 = arith.constant 0.001953125 : f32
    %64 = vector.broadcast %cst_28 : f32 to vector<8x1xf32>
    %65 = arith.mulf %63, %64 : vector<8x1xf32>
    %c0_29 = arith.constant 0 : index
    %c0_30 = arith.constant 0 : index
    %66 = vector.load %arg4[%c0_29, %c0_30] : memref<8x1xf32, #tpu.memory_space<vmem>>, vector<8x1xf32>
    %cst_31 = arith.constant 9.99999974E-6 : f32
    %67 = vector.broadcast %cst_31 : f32 to vector<8x1xf32>
    %68 = arith.addf %65, %67 : vector<8x1xf32>
    %69 = math.rsqrt %68 : vector<8x1xf32>
    %70 = arith.mulf %66, %69 : vector<8x1xf32>
    %71 = vector.broadcast %70 : vector<8x1xf32> to vector<8x256xf32>
    %72 = arith.mulf %58, %71 : vector<8x256xf32>
    %c0_32 = arith.constant 0 : index
    %c0_33 = arith.constant 0 : index
    %73 = vector.load %arg5[%c0_32, %c0_33] : memref<8x1xf32, #tpu.memory_space<vmem>>, vector<8x1xf32>
    %74 = vector.broadcast %73 : vector<8x1xf32> to vector<8x256xf32>
    %75 = arith.addf %72, %74 : vector<8x256xf32>
    %c0_34 = arith.constant 0 : index
    %76 = memref.load %arg6[%c0_34] : memref<1xf32, #tpu.memory_space<smem>>
    %cst_35 = arith.constant 0.000000e+00 : f32
    %77 = vector.broadcast %cst_35 : f32 to vector<8x256xf32>
    %78 = arith.cmpf oge, %75, %77 : vector<8x256xf32>
    %79 = vector.broadcast %76 : f32 to vector<8x256xf32>
    %80 = arith.mulf %79, %75 : vector<8x256xf32>
    %81 = arith.select %78, %75, %80 : vector<8x256xi1>, vector<8x256xf32>
    %c17_i32_36 = arith.constant 17 : i32
    %82 = tpu.dynamic_rotate %81 by %c17_i32_36 dim 1 : vector<8x256xf32>, i32 -> vector<8x256xf32>
    %83 = vector.broadcast %1 : vector<1x256xf32> to vector<8x256xf32>
    %84 = arith.mulf %82, %83 : vector<8x256xf32>
    %c16_i32_37 = arith.constant 16 : i32
    %85 = tpu.dynamic_rotate %81 by %c16_i32_37 dim 1 : vector<8x256xf32>, i32 -> vector<8x256xf32>
    %86 = vector.broadcast %3 : vector<1x256xf32> to vector<8x256xf32>
    %87 = arith.mulf %85, %86 : vector<8x256xf32>
    %c15_i32_38 = arith.constant 15 : i32
    %88 = tpu.dynamic_rotate %81 by %c15_i32_38 dim 1 : vector<8x256xf32>, i32 -> vector<8x256xf32>
    %89 = vector.broadcast %5 : vector<1x256xf32> to vector<8x256xf32>
    %90 = arith.mulf %88, %89 : vector<8x256xf32>
    %c1_i32_39 = arith.constant 1 : i32
    %91 = tpu.dynamic_rotate %81 by %c1_i32_39 dim 1 : vector<8x256xf32>, i32 -> vector<8x256xf32>
    %92 = vector.broadcast %7 : vector<1x256xf32> to vector<8x256xf32>
    %93 = arith.mulf %91, %92 : vector<8x256xf32>
    %94 = vector.broadcast %9 : vector<1x256xf32> to vector<8x256xf32>
    %95 = arith.mulf %81, %94 : vector<8x256xf32>
    %c255_i32_40 = arith.constant 255 : i32
    %96 = tpu.dynamic_rotate %81 by %c255_i32_40 dim 1 : vector<8x256xf32>, i32 -> vector<8x256xf32>
    %97 = vector.broadcast %11 : vector<1x256xf32> to vector<8x256xf32>
    %98 = arith.mulf %96, %97 : vector<8x256xf32>
    %c241_i32_41 = arith.constant 241 : i32
    %99 = tpu.dynamic_rotate %81 by %c241_i32_41 dim 1 : vector<8x256xf32>, i32 -> vector<8x256xf32>
    %100 = vector.broadcast %13 : vector<1x256xf32> to vector<8x256xf32>
    %101 = arith.mulf %99, %100 : vector<8x256xf32>
    %c240_i32_42 = arith.constant 240 : i32
    %102 = tpu.dynamic_rotate %81 by %c240_i32_42 dim 1 : vector<8x256xf32>, i32 -> vector<8x256xf32>
    %103 = vector.broadcast %15 : vector<1x256xf32> to vector<8x256xf32>
    %104 = arith.mulf %102, %103 : vector<8x256xf32>
    %c239_i32_43 = arith.constant 239 : i32
    %105 = tpu.dynamic_rotate %81 by %c239_i32_43 dim 1 : vector<8x256xf32>, i32 -> vector<8x256xf32>
    %106 = vector.broadcast %17 : vector<1x256xf32> to vector<8x256xf32>
    %107 = arith.mulf %105, %106 : vector<8x256xf32>
    %108 = tpu.concatenate %84, %87, %90, %93, %95, %98, %101, %104, %107 in 0 : vector<8x256xf32>, vector<8x256xf32>, vector<8x256xf32>, vector<8x256xf32>, vector<8x256xf32>, vector<8x256xf32>, vector<8x256xf32>, vector<8x256xf32>, vector<8x256xf32> -> vector<72x256xf32>
    %c0_44 = arith.constant 0 : index
    %c0_45 = arith.constant 0 : index
    %109 = vector.load %arg7[%c0_44, %c0_45] : memref<8x72xf32, #tpu.memory_space<vmem>>, vector<8x72xf32>
    %cst_46 = arith.constant dense<0.000000e+00> : vector<8x256xf32>
    %110 = tpu.matmul %109, %108, %cst_46 {dimension_numbers = #tpu.dot_dimension_numbers<[1], [0], [0], [1], [0, 0, 1, 1], [], []>} : vector<8x72xf32>, vector<72x256xf32>, vector<8x256xf32> -> vector<8x256xf32>
    %c0_47 = arith.constant 0 : index
    %c0_48 = arith.constant 0 : index
    %111 = vector.load %arg8[%c0_47, %c0_48] : memref<8x1xf32, #tpu.memory_space<vmem>>, vector<8x1xf32>
    %112 = vector.broadcast %111 : vector<8x1xf32> to vector<8x256xf32>
    %113 = arith.addf %110, %112 : vector<8x256xf32>
    %c4_i32_49 = arith.constant 4 : i32
    %114 = tpu.dynamic_rotate %113 by %c4_i32_49 dim 0 : vector<8x256xf32>, i32 -> vector<8x256xf32>
    %115 = arith.addf %113, %114 : vector<8x256xf32>
    %cst_50 = arith.constant dense<0.000000e+00> : vector<8xf32>
    %116 = vector.multi_reduction <add>, %115, %cst_50 [1] : vector<8x256xf32> to vector<8xf32>
    %117 = vector.shape_cast %116 : vector<8xf32> to vector<8x1xf32>
    %cst_51 = arith.constant 0.001953125 : f32
    %118 = vector.broadcast %cst_51 : f32 to vector<8x1xf32>
    %119 = arith.mulf %117, %118 : vector<8x1xf32>
    %120 = vector.broadcast %119 : vector<8x1xf32> to vector<8x256xf32>
    %121 = arith.subf %113, %120 : vector<8x256xf32>
    %122 = arith.mulf %121, %121 : vector<8x256xf32>
    %c4_i32_52 = arith.constant 4 : i32
    %123 = tpu.dynamic_rotate %122 by %c4_i32_52 dim 0 : vector<8x256xf32>, i32 -> vector<8x256xf32>
    %124 = arith.addf %122, %123 : vector<8x256xf32>
    %cst_53 = arith.constant dense<0.000000e+00> : vector<8xf32>
    %125 = vector.multi_reduction <add>, %124, %cst_53 [1] : vector<8x256xf32> to vector<8xf32>
    %126 = vector.shape_cast %125 : vector<8xf32> to vector<8x1xf32>
    %cst_54 = arith.constant 0.001953125 : f32
    %127 = vector.broadcast %cst_54 : f32 to vector<8x1xf32>
    %128 = arith.mulf %126, %127 : vector<8x1xf32>
    %c0_55 = arith.constant 0 : index
    %c0_56 = arith.constant 0 : index
    %129 = vector.load %arg9[%c0_55, %c0_56] : memref<8x1xf32, #tpu.memory_space<vmem>>, vector<8x1xf32>
    %cst_57 = arith.constant 9.99999974E-6 : f32
    %130 = vector.broadcast %cst_57 : f32 to vector<8x1xf32>
    %131 = arith.addf %128, %130 : vector<8x1xf32>
    %132 = math.rsqrt %131 : vector<8x1xf32>
    %133 = arith.mulf %129, %132 : vector<8x1xf32>
    %134 = vector.broadcast %133 : vector<8x1xf32> to vector<8x256xf32>
    %135 = arith.mulf %121, %134 : vector<8x256xf32>
    %c0_58 = arith.constant 0 : index
    %c0_59 = arith.constant 0 : index
    %136 = vector.load %arg10[%c0_58, %c0_59] : memref<8x1xf32, #tpu.memory_space<vmem>>, vector<8x1xf32>
    %137 = vector.broadcast %136 : vector<8x1xf32> to vector<8x256xf32>
    %138 = arith.addf %135, %137 : vector<8x256xf32>
    %139 = arith.addf %18, %138 : vector<8x256xf32>
    %c0_60 = arith.constant 0 : index
    %c0_61 = arith.constant 0 : index
    %140 = vector.load %arg11[%c0_60, %c0_61] : memref<8x256xf32, #tpu.memory_space<vmem>>, vector<8x256xf32>
    tpu.vector_store %arg11[%c0_60, %c0_61], %139 {strides = array<i32>} : memref<8x256xf32, #tpu.memory_space<vmem>>, vector<8x256xf32>,
    return
  }
}

</mosaic_0001>

<llo_original>
// kernel: tpu_custom_call.1
$region0: #{tpu_custom_call.1}
  #allocation0 [shape = 'u32[]', space=smem, size = 0x4, offset = 0x4, fixed_abs, tag = 'smem constant byte address 0x4 - core index']
  #allocation1 [shape = 'u32[72,128]{1,0:T(1,128)}', space=vmem, size = 0x9000, scoped, tag = 'internal scratch']
  #allocation2 [shape = 'f32[1]{0:T(128)S(6)}', space=smem, size = 0x200, scoped, tag = 'scoped memory for tpu_custom_call.1']
  %s0 = inlined_call_operand.vmem [shape: f32[8,256], index: 0, kind: input, shape index: {}]
  %s1 = inlined_call_operand.hbm [shape: f32[9,1,256], index: 1, kind: input, shape index: {}]
  %s2 = inlined_call_operand.vmem [shape: f32[8,72], index: 2, kind: input, shape index: {}]
  %s3 = inlined_call_operand.vmem [shape: f32[8,1], index: 3, kind: input, shape index: {}]
  %s4 = inlined_call_operand.vmem [shape: f32[8,1], index: 4, kind: input, shape index: {}]
  %s5 = inlined_call_operand.vmem [shape: f32[8,1], index: 5, kind: input, shape index: {}]
  %s6 = inlined_call_operand.<no memory space> [shape: f32[1], index: 6, kind: input, shape index: {}]
  %s7 = inlined_call_operand.vmem [shape: f32[8,72], index: 7, kind: input, shape index: {}]
  %s8 = inlined_call_operand.vmem [shape: f32[8,1], index: 8, kind: input, shape index: {}]
  %s9 = inlined_call_operand.vmem [shape: f32[8,1], index: 9, kind: input, shape index: {}]
  %s10 = inlined_call_operand.vmem [shape: f32[8,1], index: 10, kind: input, shape index: {}]
  %s11 = inlined_call_operand.hbm [shape: f32[8,256], index: 11, kind: output, shape index: {}]
  %s12 = sld [smem:[#allocation0]]
  $region58: #{tpu_custom_call.1} parent=0
    _
  %s14 = ssub.s32 1, %s12
  %s15 = scalar_select 0, %s14, %s12
  %16 = sst [smem:[#allocation2]] %s6
  $region1: #{tpu_custom_call.1} parent=0
    #allocation3 [shape = 'u8[9216]{0}', space=vmem, size = 0x2400, scoped, tag = 'input window, operand 1, single buffered']
    #allocation4 [shape = 's32[1]{0}', space=sflag, size = 0x4, scoped, tag = 'scoped memory for tpu_custom_call.1']
    #allocation5 [shape = 's32[1]{0}', space=sflag, size = 0x4, scoped, tag = 'scoped memory for tpu_custom_call.1']
    #allocation6 [shape = 'u8[8192]{0}', space=vmem, size = 0x2000, scoped, tag = 'output window, operand 0, single buffered']
    %17 = vsyncpa [#allocation4], 0
    %18 = vsyncpa [#allocation5], 0
    // Predicated region
    $region2: #{tpu_custom_call.1} parent=1 // pred_check
      _
    $region3: #{tpu_custom_call.1} parent=1 // pred_check_branch
      %20 = sbr.rel (0) target = $region5
    $region4: #{tpu_custom_call.1} parent=1 // pred_region
      _
    $region5: #{tpu_custom_call.1} parent=1 // pred_fallthru
      _
    // Predicated region
    $region6: #{tpu_custom_call.1} parent=1 // pred_check
      _
    $region7: #{tpu_custom_call.1} parent=1 // pred_check_branch
      %22 = sbr.rel (0) target = $region9
    $region8: #{tpu_custom_call.1} parent=1 // pred_region
      %24 = vsyncadd [#allocation4], 0
      %s25 = sshll.u32 %s1, 4
      %s26 = int_to_ptr.hbm [resolvable:$true] %s25
      %s27 = sshll.u32 [#allocation3], 4
      %s28 = int_to_ptr.vmem [resolvable:$true] %s27
      %33 = dma.hbm_to_vmem [thread:$0]  %s26, 288, %s28, [#allocation4], 32, 32, 2
    $region9: #{tpu_custom_call.1} parent=1 // pred_fallthru
      _
    // Predicated region
    $region10: #{tpu_custom_call.1} parent=1 // pred_check
      _
    $region11: #{tpu_custom_call.1} parent=1 // pred_check_branch
      %35 = sbr.rel (0) target = $region13
    $region12: #{tpu_custom_call.1} parent=1 // pred_region
      _
    $region13: #{tpu_custom_call.1} parent=1 // pred_fallthru
      _
    // Predicated region
    $region14: #{tpu_custom_call.1} parent=1 // pred_check
      _
    $region15: #{tpu_custom_call.1} parent=1 // pred_check_branch
      %37 = sbr.rel (0) target = $region17
    $region16: #{tpu_custom_call.1} parent=1 // pred_region
      _
    $region17: #{tpu_custom_call.1} parent=1 // pred_fallthru
      _
    // Predicated region
    $region18: #{tpu_custom_call.1} parent=1 // pred_check
      _
    $region19: #{tpu_custom_call.1} parent=1 // pred_check_branch
      %39 = sbr.rel (0) target = $region21
    $region20: #{tpu_custom_call.1} parent=1 // pred_region
      _
    $region21: #{tpu_custom_call.1} parent=1 // pred_fallthru
      _
    // Predicated region
    $region22: #{tpu_custom_call.1} parent=1 // pred_check
      _
    $region23: #{tpu_custom_call.1} parent=1 // pred_check_branch
      %41 = sbr.rel (0) target = $region25
    $region24: #{tpu_custom_call.1} parent=1 // pred_region
      _
    $region25: #{tpu_custom_call.1} parent=1 // pred_fallthru
      _
    // Predicated region
    $region26: #{tpu_custom_call.1} parent=1 // pred_check
      _
    $region27: #{tpu_custom_call.1} parent=1 // pred_check_branch
      %43 = sbr.rel (0) target = $region29
    $region28: #{tpu_custom_call.1} parent=1 // pred_region
      _
    $region29: #{tpu_custom_call.1} parent=1 // pred_fallthru
      _
    // Predicated region
    $region30: #{tpu_custom_call.1} parent=1 // pred_check
      _
    $region31: #{tpu_custom_call.1} parent=1 // pred_check_branch
      %45 = sbr.rel (0) target = $region33
    $region32: #{tpu_custom_call.1} parent=1 // pred_region
      _
    $region33: #{tpu_custom_call.1} parent=1 // pred_fallthru
      _
    // Predicated region
    $region34: #{tpu_custom_call.1} parent=1 // pred_check
      _
    $region35: #{tpu_custom_call.1} parent=1 // pred_check_branch
      %47 = sbr.rel (0) target = $region37
    $region36: #{tpu_custom_call.1} parent=1 // pred_region
      _
    $region37: #{tpu_custom_call.1} parent=1 // pred_fallthru
      _
    // Predicated region
    $region38: #{tpu_custom_call.1} parent=1 // pred_check
      _
    $region39: #{tpu_custom_call.1} parent=1 // pred_check_branch
      %49 = sbr.rel (0) target = $region41
    $region40: #{tpu_custom_call.1} parent=1 // pred_region
      _
    $region41: #{tpu_custom_call.1} parent=1 // pred_fallthru
      _
    // Predicated region
    $region42: #{tpu_custom_call.1} parent=1 // pred_check
      _
    $region43: #{tpu_custom_call.1} parent=1 // pred_check_branch
      %51 = sbr.rel (0) target = $region45
    $region44: #{tpu_custom_call.1} parent=1 // pred_region
      _
    $region45: #{tpu_custom_call.1} parent=1 // pred_fallthru
      _
    // Predicated region
    $region46: #{tpu_custom_call.1} parent=1 // pred_check
      _
    $region47: #{tpu_custom_call.1} parent=1 // pred_check_branch
      %53 = sbr.rel (0) target = $region49
    $region48: #{tpu_custom_call.1} parent=1 // pred_region
      %55 = dma.done [#allocation4], 288
    $region49: #{tpu_custom_call.1} parent=1 // pred_fallthru
      _
    %v56 = vld [vmem:[#allocation3] sm:$0x3]
    %s57 = scalar_lea.vmem [#allocation3], 2
    %v58 = vld [vmem:[%s57] sm:$0x3]
    %s59 = scalar_lea.vmem [#allocation3], 4
    %v60 = vld [vmem:[%s59] sm:$0x3]
    %s61 = scalar_lea.vmem [#allocation3], 6
    %v62 = vld [vmem:[%s61] sm:$0x3]
    %s63 = scalar_lea.vmem [#allocation3], 8
    %v64 = vld [vmem:[%s63] sm:$0x3]
    %s65 = scalar_lea.vmem [#allocation3], 10
    %v66 = vld [vmem:[%s65] sm:$0x3]
    %s67 = scalar_lea.vmem [#allocation3], 12
    %v68 = vld [vmem:[%s67] sm:$0x3]
    %s69 = scalar_lea.vmem [#allocation3], 14
    %v70 = vld [vmem:[%s69] sm:$0x3]
    %s71 = scalar_lea.vmem [#allocation3], 16
    %v72 = vld [vmem:[%s71] sm:$0x3]
    %v73 = vld [vmem:[%s0] sm:$0xff]
    %v74 = vld [vmem:[%s0 + $0x8] sm:$0xff]
    %75 = vrot.lane.b32.xlu0 %v73, 17
    %v76 = vpop.permute.xlu0 %75
    %77 = vrot.lane.b32.xlu0 %v74, 17
    %v78 = vpop.permute.xlu0 %77
    %v79 = vlaneseq
    %v80 = vand.u32 %v79, 127
    %vm81 = vcmp.lt.s32.totalorder %v80, 17
    %v82 = vsel %vm81, %v76, %v78
    %v83 = vsel %vm81, %v78, %v76
    %v85 = vperm.slane %v56, 0
    %v86 = vperm.slane %v56, 1
    %v89 = vmul.f32 %v83, %v85
    %v90 = vmul.f32 %v82, %v86
    %91 = vrot.lane.b32.xlu0 %v73, 16
    %v92 = vpop.permute.xlu0 %91
    %93 = vrot.lane.b32.xlu0 %v74, 16
    %v94 = vpop.permute.xlu0 %93
    %vm95 = vcmp.lt.s32.totalorder %v80, 16
    %v96 = vsel %vm95, %v92, %v94
    %v97 = vsel %vm95, %v94, %v92
    %v99 = vperm.slane %v58, 0
    %v100 = vperm.slane %v58, 1
    %v103 = vmul.f32 %v97, %v99
    %v104 = vmul.f32 %v96, %v100
    %105 = vrot.lane.b32.xlu0 %v73, 15
    %v106 = vpop.permute.xlu0 %105
    %107 = vrot.lane.b32.xlu0 %v74, 15
    %v108 = vpop.permute.xlu0 %107
    %vm109 = vcmp.lt.s32.totalorder %v80, 15
    %v110 = vsel %vm109, %v106, %v108
    %v111 = vsel %vm109, %v108, %v106
    %v113 = vperm.slane %v60, 0
    %v114 = vperm.slane %v60, 1
    %v117 = vmul.f32 %v111, %v113
    %v118 = vmul.f32 %v110, %v114
    %119 = vrot.lane.b32.xlu0 %v73, 1
    %v120 = vpop.permute.xlu0 %119
    %121 = vrot.lane.b32.xlu0 %v74, 1
    %v122 = vpop.permute.xlu0 %121
    %vm123 = vcmp.lt.s32.totalorder %v80, 1
    %v124 = vsel %vm123, %v120, %v122
    %v125 = vsel %vm123, %v122, %v120
    %v127 = vperm.slane %v62, 0
    %v128 = vperm.slane %v62, 1
    %v131 = vmul.f32 %v125, %v127
    %v132 = vmul.f32 %v124, %v128
    %v134 = vperm.slane %v64, 0
    %v135 = vperm.slane %v64, 1
    %v138 = vmul.f32 %v73, %v134
    %v139 = vmul.f32 %v74, %v135
    %140 = vrot.lane.b32.xlu0 %v73, 127
    %v141 = vpop.permute.xlu0 %140
    %142 = vrot.lane.b32.xlu0 %v74, 127
    %v143 = vpop.permute.xlu0 %142
    %vm144 = vcmp.lt.s32.totalorder %v80, 127
    %v145 = vsel %vm144, %v141, %v143
    %v146 = vsel %vm144, %v143, %v141
    %v148 = vperm.slane %v66, 0
    %v149 = vperm.slane %v66, 1
    %v152 = vmul.f32 %v145, %v148
    %v153 = vmul.f32 %v146, %v149
    %154 = vrot.lane.b32.xlu0 %v73, 113
    %v155 = vpop.permute.xlu0 %154
    %156 = vrot.lane.b32.xlu0 %v74, 113
    %v157 = vpop.permute.xlu0 %156
    %vm158 = vcmp.lt.s32.totalorder %v80, 113
    %v159 = vsel %vm158, %v155, %v157
    %v160 = vsel %vm158, %v157, %v155
    %v162 = vperm.slane %v68, 0
    %v163 = vperm.slane %v68, 1
    %v166 = vmul.f32 %v159, %v162
    %v167 = vmul.f32 %v160, %v163
    %168 = vrot.lane.b32.xlu0 %v73, 112
    %v169 = vpop.permute.xlu0 %168
    %170 = vrot.lane.b32.xlu0 %v74, 112
    %v171 = vpop.permute.xlu0 %170
    %vm172 = vcmp.lt.s32.totalorder %v80, 112
    %v173 = vsel %vm172, %v169, %v171
    %v174 = vsel %vm172, %v171, %v169
    %v176 = vperm.slane %v70, 0
    %v177 = vperm.slane %v70, 1
    %v180 = vmul.f32 %v173, %v176
    %v181 = vmul.f32 %v174, %v177
    %182 = vrot.lane.b32.xlu0 %v73, 111
    %v183 = vpop.permute.xlu0 %182
    %184 = vrot.lane.b32.xlu0 %v74, 111
    %v185 = vpop.permute.xlu0 %184
    %vm186 = vcmp.lt.s32.totalorder %v80, 111
    %v187 = vsel %vm186, %v183, %v185
    %v188 = vsel %vm186, %v185, %v183
    %v190 = vperm.slane %v72, 0
    %v191 = vperm.slane %v72, 1
    %v194 = vmul.f32 %v187, %v190
    %v195 = vmul.f32 %v188, %v191
    %v196 = vld [vmem:[%s2] sm:$0xff]
    %v197 = vld [vmem:[%s3] sm:$0xff]
    %199 = vset.pattern.permute.xlu0 0
    %200 = vperm.xlu0 %199, %v197
    %v201 = vpop.permute.xlu0 %200
    %vm203 = vcmask 588800
    %v205 = vsel %vm203, %v196, 0
    %207 = vmatpush.msra.mxu0 0.0
    %208 = vmatpush.msra.mxu0 0.0
    %209 = vmatpush.msra.mxu0 0.0
    %210 = vmatpush.msra.mxu0 0.0
    %211 = vmatpush.msra.mxu0 0.0
    %212 = vmatpush.msra.mxu0 0.0
    %213 = vmatpush.msra.mxu0 0.0
    %214 = vmatpush.msra.mxu0 %v194
    %215 = vmatpush.msra.mxu0 %v180
    %216 = vmatpush.msra.mxu0 %v166
    %217 = vmatpush.msra.mxu0 %v152
    %218 = vmatpush.msra.mxu0 %v138
    %219 = vmatpush.msra.mxu0 %v131
    %220 = vmatpush.msra.mxu0 %v117
    %221 = vmatpush.msra.mxu0 %v103
    %222 = vmatpush.msra.mxu0 %v89
    %223 = vmatmul.f32.gmra.mxu0 %v205
    %v224 = vpop.f32.mrf.mxu0
    %v225 = vadd.f32 %v201, %v224
    %226 = vdwg.mxu0
    %227 = vmatpush.msra.mxu0 0.0
    %228 = vmatpush.msra.mxu0 0.0
    %229 = vmatpush.msra.mxu0 0.0
    %230 = vmatpush.msra.mxu0 0.0
    %231 = vmatpush.msra.mxu0 0.0
    %232 = vmatpush.msra.mxu0 0.0
    %233 = vmatpush.msra.mxu0 0.0
    %234 = vmatpush.msra.mxu0 %v195
    %235 = vmatpush.msra.mxu0 %v181
    %236 = vmatpush.msra.mxu0 %v167
    %237 = vmatpush.msra.mxu0 %v153
    %238 = vmatpush.msra.mxu0 %v139
    %239 = vmatpush.msra.mxu0 %v132
    %240 = vmatpush.msra.mxu0 %v118
    %241 = vmatpush.msra.mxu0 %v104
    %242 = vmatpush.msra.mxu0 %v90
    %243 = vmatmul.f32.gmra.mxu0 %v205
    %v244 = vpop.f32.mrf.mxu0
    %v245 = vadd.f32 %v201, %v244
    %246 = vdwg.mxu0
    %v247 = vrot.slane %v225, 4
    %v248 = vrot.slane %v245, 4
    %v249 = vadd.f32 %v225, %v247
    %v250 = vadd.f32 %v245, %v248
    %v251 = vadd.f32 %v249, %v250
    %252 = vadd.xlane.f32.xlu0 %v251
    %v253 = vpop.xlane.xlu0 %252
    %v254 = vmul.f32 %v253, 0.001953125
    %v255 = vsub.f32 %v225, %v254
    %v256 = vsub.f32 %v245, %v254
    %v257 = vmul.f32 %v255, %v255
    %v258 = vmul.f32 %v256, %v256
    %v259 = vrot.slane %v257, 4
    %v260 = vrot.slane %v258, 4
    %v261 = vadd.f32 %v257, %v259
    %v262 = vadd.f32 %v258, %v260
    %v263 = vadd.f32 %v261, %v262
    %264 = vadd.xlane.f32.xlu0 %v263
    %v265 = vpop.xlane.xlu0 %264
    %v266 = vmul.f32 %v265, 0.001953125
    %v267 = vld [vmem:[%s4] sm:$0xff]
    %v268 = vadd.f32 %v266, 1e-05
    %v269 = vrsqrt.pop %v268
    %v270 = vmul.f32 %v269, %v268
    %v271 = vmul.f32 %v270, %v269
    %v272 = vmul.f32 0.5, %v271
    %v273 = vsub.f32 1.5, %v272
    %v274 = vmul.f32 %v269, %v273
    %vm275 = vweird.f32 %v268
    %vm276 = vweird.f32 %v269
    %vm277 = vmor %vm275, %vm276
    %v278 = vsel %vm277, %v269, %v274
    %v279 = vmul.f32 %v267, %v278
    %281 = vset.pattern.permute.xlu0 0
    %282 = vperm.xlu0 %281, %v279
    %v283 = vpop.permute.xlu0 %282
    %v285 = vmul.f32 %v255, %v283
    %v286 = vmul.f32 %v256, %v283
    %v287 = vld [vmem:[%s5] sm:$0xff]
    %289 = vset.pattern.permute.xlu0 0
    %290 = vperm.xlu0 %289, %v287
    %v291 = vpop.permute.xlu0 %290
    %v293 = vadd.f32 %v285, %v291
    %v294 = vadd.f32 %v286, %v291
    %s295 = sld [smem:[#allocation2]]
    %vm296 = vcmp.ge.f32.partialorder %v293, 0.0
    %vm297 = vcmp.ge.f32.partialorder %v294, 0.0
    %v298 = vstv %s295
    %v299 = vmul.f32 %v298, %v293
    %v300 = vmul.f32 %v298, %v294
    %v301 = vsel %vm296, %v293, %v299
    %v302 = vsel %vm297, %v294, %v300
    %303 = vrot.lane.b32.xlu0 %v301, 17
    %v304 = vpop.permute.xlu0 %303
    %305 = vrot.lane.b32.xlu0 %v302, 17
    %v306 = vpop.permute.xlu0 %305
    %v307 = vsel %vm81, %v304, %v306
    %v308 = vsel %vm81, %v306, %v304
    %v309 = vmul.f32 %v308, %v85
    %v310 = vmul.f32 %v307, %v86
    %311 = vrot.lane.b32.xlu0 %v301, 16
    %v312 = vpop.permute.xlu0 %311
    %313 = vrot.lane.b32.xlu0 %v302, 16
    %v314 = vpop.permute.xlu0 %313
    %v315 = vsel %vm95, %v312, %v314
    %v316 = vsel %vm95, %v314, %v312
    %v317 = vmul.f32 %v316, %v99
    %v318 = vmul.f32 %v315, %v100
    %319 = vrot.lane.b32.xlu0 %v301, 15
    %v320 = vpop.permute.xlu0 %319
    %321 = vrot.lane.b32.xlu0 %v302, 15
    %v322 = vpop.permute.xlu0 %321
    %v323 = vsel %vm109, %v320, %v322
    %v324 = vsel %vm109, %v322, %v320
    %v325 = vmul.f32 %v324, %v113
    %v326 = vmul.f32 %v323, %v114
    %327 = vrot.lane.b32.xlu0 %v301, 1
    %v328 = vpop.permute.xlu0 %327
    %329 = vrot.lane.b32.xlu0 %v302, 1
    %v330 = vpop.permute.xlu0 %329
    %v331 = vsel %vm123, %v328, %v330
    %v332 = vsel %vm123, %v330, %v328
    %v333 = vmul.f32 %v332, %v127
    %v334 = vmul.f32 %v331, %v128
    %v335 = vmul.f32 %v301, %v134
    %v336 = vmul.f32 %v302, %v135
    %337 = vrot.lane.b32.xlu0 %v301, 127
    %v338 = vpop.permute.xlu0 %337
    %339 = vrot.lane.b32.xlu0 %v302, 127
    %v340 = vpop.permute.xlu0 %339
    %v341 = vsel %vm144, %v338, %v340
    %v342 = vsel %vm144, %v340, %v338
    %v343 = vmul.f32 %v341, %v148
    %v344 = vmul.f32 %v342, %v149
    %345 = vrot.lane.b32.xlu0 %v301, 113
    %v346 = vpop.permute.xlu0 %345
    %347 = vrot.lane.b32.xlu0 %v302, 113
    %v348 = vpop.permute.xlu0 %347
    %v349 = vsel %vm158, %v346, %v348
    %v350 = vsel %vm158, %v348, %v346
    %v351 = vmul.f32 %v349, %v162
    %v352 = vmul.f32 %v350, %v163
    %353 = vrot.lane.b32.xlu0 %v301, 112
    %v354 = vpop.permute.xlu0 %353
    %355 = vrot.lane.b32.xlu0 %v302, 112
    %v356 = vpop.permute.xlu0 %355
    %v357 = vsel %vm172, %v354, %v356
    %v358 = vsel %vm172, %v356, %v354
    %v359 = vmul.f32 %v357, %v176
    %v360 = vmul.f32 %v358, %v177
    %361 = vrot.lane.b32.xlu0 %v301, 111
    %v362 = vpop.permute.xlu0 %361
    %363 = vrot.lane.b32.xlu0 %v302, 111
    %v364 = vpop.permute.xlu0 %363
    %v365 = vsel %vm186, %v362, %v364
    %v366 = vsel %vm186, %v364, %v362
    %v367 = vmul.f32 %v365, %v190
    %v368 = vmul.f32 %v366, %v191
    %v369 = vld [vmem:[%s7] sm:$0xff]
    %v370 = vld [vmem:[%s8] sm:$0xff]
    %372 = vset.pattern.permute.xlu0 0
    %373 = vperm.xlu0 %372, %v370
    %v374 = vpop.permute.xlu0 %373
    %v377 = vsel %vm203, %v369, 0
    %379 = vmatpush.msra.mxu0 0.0
    %380 = vmatpush.msra.mxu0 0.0
    %381 = vmatpush.msra.mxu0 0.0
    %382 = vmatpush.msra.mxu0 0.0
    %383 = vmatpush.msra.mxu0 0.0
    %384 = vmatpush.msra.mxu0 0.0
    %385 = vmatpush.msra.mxu0 0.0
    %386 = vmatpush.msra.mxu0 %v367
    %387 = vmatpush.msra.mxu0 %v359
    %388 = vmatpush.msra.mxu0 %v351
    %389 = vmatpush.msra.mxu0 %v343
    %390 = vmatpush.msra.mxu0 %v335
    %391 = vmatpush.msra.mxu0 %v333
    %392 = vmatpush.msra.mxu0 %v325
    %393 = vmatpush.msra.mxu0 %v317
    %394 = vmatpush.msra.mxu0 %v309
    %395 = vmatmul.f32.gmra.mxu0 %v377
    %v396 = vpop.f32.mrf.mxu0
    %v397 = vadd.f32 %v374, %v396
    %398 = vdwg.mxu0
    %399 = vmatpush.msra.mxu0 0.0
    %400 = vmatpush.msra.mxu0 0.0
    %401 = vmatpush.msra.mxu0 0.0
    %402 = vmatpush.msra.mxu0 0.0
    %403 = vmatpush.msra.mxu0 0.0
    %404 = vmatpush.msra.mxu0 0.0
    %405 = vmatpush.msra.mxu0 0.0
    %406 = vmatpush.msra.mxu0 %v368
    %407 = vmatpush.msra.mxu0 %v360
    %408 = vmatpush.msra.mxu0 %v352
    %409 = vmatpush.msra.mxu0 %v344
    %410 = vmatpush.msra.mxu0 %v336
    %411 = vmatpush.msra.mxu0 %v334
    %412 = vmatpush.msra.mxu0 %v326
    %413 = vmatpush.msra.mxu0 %v318
    %414 = vmatpush.msra.mxu0 %v310
    %415 = vmatmul.f32.gmra.mxu0 %v377
    %v416 = vpop.f32.mrf.mxu0
    %v417 = vadd.f32 %v374, %v416
    %418 = vdwg.mxu0
    %v419 = vrot.slane %v397, 4
    %v420 = vrot.slane %v417, 4
    %v421 = vadd.f32 %v397, %v419
    %v422 = vadd.f32 %v417, %v420
    %v423 = vadd.f32 %v421, %v422
    %424 = vadd.xlane.f32.xlu0 %v423
    %v425 = vpop.xlane.xlu0 %424
    %v426 = vmul.f32 %v425, 0.001953125
    %v427 = vsub.f32 %v397, %v426
    %v428 = vsub.f32 %v417, %v426
    %v429 = vmul.f32 %v427, %v427
    %v430 = vmul.f32 %v428, %v428
    %v431 = vrot.slane %v429, 4
    %v432 = vrot.slane %v430, 4
    %v433 = vadd.f32 %v429, %v431
    %v434 = vadd.f32 %v430, %v432
    %v435 = vadd.f32 %v433, %v434
    %436 = vadd.xlane.f32.xlu0 %v435
    %v437 = vpop.xlane.xlu0 %436
    %v438 = vmul.f32 %v437, 0.001953125
    %v439 = vld [vmem:[%s9] sm:$0xff]
    %v440 = vadd.f32 %v438, 1e-05
    %v441 = vrsqrt.pop %v440
    %v442 = vmul.f32 %v441, %v440
    %v443 = vmul.f32 %v442, %v441
    %v444 = vmul.f32 0.5, %v443
    %v445 = vsub.f32 1.5, %v444
    %v446 = vmul.f32 %v441, %v445
    %vm447 = vweird.f32 %v440
    %vm448 = vweird.f32 %v441
    %vm449 = vmor %vm447, %vm448
    %v450 = vsel %vm449, %v441, %v446
    %v451 = vmul.f32 %v439, %v450
    %453 = vset.pattern.permute.xlu0 0
    %454 = vperm.xlu0 %453, %v451
    %v455 = vpop.permute.xlu0 %454
    %v457 = vmul.f32 %v427, %v455
    %v458 = vmul.f32 %v428, %v455
    %v459 = vld [vmem:[%s10] sm:$0xff]
    %461 = vset.pattern.permute.xlu0 0
    %462 = vperm.xlu0 %461, %v459
    %v463 = vpop.permute.xlu0 %462
    %v465 = vadd.f32 %v457, %v463
    %v466 = vadd.f32 %v458, %v463
    %v467 = vadd.f32 %v73, %v465
    %v468 = vadd.f32 %v74, %v466
    %469 = vst [vmem:[#allocation6] sm:$0xff] %v467
    %470 = vst [vmem:[#allocation6 + $0x8] sm:$0xff] %v468
    // Predicated region
    $region50: #{tpu_custom_call.1} parent=1 // pred_check
      _
    $region51: #{tpu_custom_call.1} parent=1 // pred_check_branch
      %472 = sbr.rel (0) target = $region53
    $region52: #{tpu_custom_call.1} parent=1 // pred_region
      %474 = vsyncadd [#allocation5], 0
      %s476 = sshll.u32 [#allocation6], 4
      %s477 = int_to_ptr.vmem [resolvable:$true] %s476
      %s478 = sshll.u32 %s11, 4
      %s479 = int_to_ptr.hbm [resolvable:$true] %s478
      %481 = dma.vmem_to_hbm [thread:$0]  %s477, 256, %s479, [#allocation5]
    $region53: #{tpu_custom_call.1} parent=1 // pred_fallthru
      _
    // Predicated region
    $region54: #{tpu_custom_call.1} parent=1 // pred_check
      _
    $region55: #{tpu_custom_call.1} parent=1 // pred_check_branch
      %483 = sbr.rel (0) target = $region57
    $region56: #{tpu_custom_call.1} parent=1 // pred_region
      %485 = dma.done [#allocation5], 256
    $region57: #{tpu_custom_call.1} parent=1 // pred_fallthru
      _
    %486 = vsyncpa [#allocation4], 1
    %487 = vsyncpa [#allocation5], 1

</llo_original>
